<compile_context>
chip_gen: v5e
topology: v5e:2x2
jax: 0.10.0
libtpu: 0.0.40
codegen_flags: <defaults>
</compile_context>

<pallas_src>
import numpy as np
import jax
import jax.numpy as jnp
from jax.experimental import pallas as pl
from jax.experimental.pallas import tpu as pltpu


# ------------------------- kernel A: Linear + SiLU ---------------------------

def _linear_silu_kernel(c_ref, w_ref, b_ref, o_ref):
    # c: (B, S), w: (S, D), b: (1, D)  ->  o = silu(c @ w + b)
    y = jnp.dot(c_ref[...], w_ref[...], preferred_element_type=jnp.float32)
    y = y + b_ref[...]
    o_ref[...] = y * (1.0 / (1.0 + jnp.exp(-y)))


def linear_silu(c, w, b):
    # TODO(synk): no B-tiling; (B,S),(S,D),(B,D) must fit VMEM in one shot
    # (fine for realistic secret-encoder sizes).
    B = c.shape[0]
    D = w.shape[1]
    return pl.pallas_call(
        _linear_silu_kernel,
        out_shape=jax.ShapeDtypeStruct((B, D), jnp.float32),
        in_specs=[pl.BlockSpec(memory_space=pltpu.MemorySpace.VMEM)] * 3,
        out_specs=pl.BlockSpec(memory_space=pltpu.MemorySpace.VMEM),
    )(c, w, b.reshape(1, D))


# ---- kernel B: fused upsample + pad + 3x3 conv + bilinear + residual add ----

def _make_fused_kernel(C):
    def kernel(bconv_ref,                      # scalar prefetch (SMEM): (C,)
               h_ref, ly_ref, m_ref, x_ref,    # inputs
               xo_ref, co_ref):                # outputs
        hb = h_ref[0]                                                  # (base, base)
        # "left" factors for the 3 vertical taps; shared across channels.
        t = [jnp.dot(ly_ref[ky], hb, preferred_element_type=jnp.float32)
             for ky in range(3)]                                       # 3 x (Hblk, base)
        for c in range(C):
            acc = jnp.dot(t[0], m_ref[0, c], preferred_element_type=jnp.float32)
            acc = acc + jnp.dot(t[1], m_ref[1, c], preferred_element_type=jnp.float32)
            acc = acc + jnp.dot(t[2], m_ref[2, c], preferred_element_type=jnp.float32)
            ci = acc + bconv_ref[c]                                    # conv bias
            co_ref[0, c] = ci
            xo_ref[0, c] = x_ref[0, c] + ci                            # fused residual
    return kernel


def _choose_hblk(H, W, C, budget_bytes=8 * 1024 * 1024):
    """Largest multiple-of-8 divisor of H whose double-buffered x/xo/co stripes
    stay within the budget (bounds per-step VMEM on v5e's 16 MiB scoped default
    and v7x's 64 MiB physical VMEM)."""
    if H % 8 != 0:
        return H                              # fall back to whole-H blocks
    per_row = 2 * 3 * C * W * 4               # 2 buffers x 3 arrays x f32 row
    cap = min(max(budget_bytes // per_row, 8), 512, H)
    if H <= cap:
        return H
    best = 8
    for d in range(8, int(cap) + 1, 8):
        if H % d == 0:
            best = d
    return best


def fused_upsample_conv_bilinear_add(h_img, x, ly, m, conv_b):
    B, base, _ = h_img.shape
    _, C, H, W = x.shape
    Hblk = _choose_hblk(H, W, C)
    n_stripes = H // Hblk
    kernel = _make_fused_kernel(C)
    out_shapes = (jax.ShapeDtypeStruct((B, C, H, W), jnp.float32),
                  jax.ShapeDtypeStruct((B, C, H, W), jnp.float32))
    grid_spec = pltpu.PrefetchScalarGridSpec(
        num_scalar_prefetch=1,                      # conv bias -> SMEM
        grid=(B, n_stripes),
        in_specs=[
            pl.BlockSpec((1, base, base), lambda b, s, *_: (b, 0, 0)),
            pl.BlockSpec((3, Hblk, base), lambda b, s, *_: (0, s, 0)),
            pl.BlockSpec((3, C, base, W), lambda b, s, *_: (0, 0, 0, 0)),
            pl.BlockSpec((1, C, Hblk, W), lambda b, s, *_: (b, 0, s, 0)),
        ],
        out_specs=[
            pl.BlockSpec((1, C, Hblk, W), lambda b, s, *_: (b, 0, s, 0)),
            pl.BlockSpec((1, C, Hblk, W), lambda b, s, *_: (b, 0, s, 0)),
        ],
    )
    return pl.pallas_call(
        kernel,
        out_shape=out_shapes,
        grid_spec=grid_spec,
        compiler_params=pltpu.CompilerParams(
            dimension_semantics=("parallel", "parallel"),
            vmem_limit_bytes=48 * 1024 * 1024),
    )(conv_b, h_img, ly, m, x)


# --------------------------- host-side constants -----------------------------

def _bilinear_matrix(out_size, in_size):
    """PyTorch F.interpolate(mode='bilinear', align_corners=False) weights."""
    # TODO(synk): cross-check numerically against torch F.interpolate for
    # downscale (out < in) and identity cases before trusting those shapes.
    scale = in_size / out_size
    M = np.zeros((out_size, in_size), dtype=np.float32)
    for i in range(out_size):
        src = (i + 0.5) * scale - 0.5
        src = max(src, 0.0)
        x0 = min(int(np.floor(src)), in_size - 1)
        x1 = min(x0 + 1, in_size - 1)
        l1 = src - x0
        M[i, x0] += 1.0 - l1
        M[i, x1] += l1
    return M


def _upsample_pad_matrix(R, base):
    """(R+2, base) 0/1 matrix: nearest upsample by R//base plus 1-px zero pad."""
    s = R // base
    M = np.zeros((R + 2, base), dtype=np.float32)
    for i in range(R):
        M[i + 1, i // s] = 1.0
    return M


def _fold_matrices(base, R, H, W):
    """Factor matrices folding upsample + pad + 3x3 tap shifts + bilinear."""
    up = _upsample_pad_matrix(R, base)                                  # (R+2, base)
    wy = _bilinear_matrix(H, R)                                         # (H, R)
    wx = _bilinear_matrix(W, R)                                         # (W, R)
    ly = np.stack([wy @ up[k:k + R, :] for k in range(3)], axis=0)      # (3, H, base)
    rx = np.stack([(wx @ up[k:k + R, :]).T for k in range(3)], axis=0)  # (3, base, W)
    return jnp.asarray(ly), jnp.asarray(rx)


def init_params(key, secret_len, base_res):
    k1, k2 = jax.random.split(key)
    bound = 1.0 / np.sqrt(secret_len)
    return {
        # stored transposed vs. PyTorch (in, out) so the kernel does c @ w
        "lin_w": jax.random.uniform(k1, (secret_len, base_res * base_res),
                                    minval=-bound, maxval=bound, dtype=jnp.float32),
        "lin_b": jax.random.uniform(k2, (base_res * base_res,),
                                    minval=-bound, maxval=bound, dtype=jnp.float32),
        # zero_module(conv_nd(2, 4, 4, 3, padding=1)) -> zero weights & bias
        "conv_w": jnp.zeros((4, 4, 3, 3), jnp.float32),
        "conv_b": jnp.zeros((4,), jnp.float32),
    }


def secret_encoder_forward(params, x, c, *, base_res, resolution):
    B = c.shape[0]
    Bx, Cx, H, W = x.shape
    assert Cx == 4 and Bx == B, "SecretEncoder assumes x is (B, 4, H, W)"
    assert resolution % base_res == 0, "nn.Upsample scale must be an integer"
    R = resolution

    # Linear + SiLU (Pallas kernel A); tiny reshape to (B, base, base)
    h = linear_silu(c, params["lin_w"], params["lin_b"])            # (B, base*base)
    h_img = h.reshape(B, base_res, base_res)

    # Repeat(4,1,1) => all conv input channels identical -> fold into weights
    w_eff = params["conv_w"].sum(axis=1)                            # (4, 3, 3)

    # Host/XLA-side tiny precompute: left factors (pure constants) and the
    # conv-weight-folded right factors (tiny einsum, once per call).
    ly, rx = _fold_matrices(base_res, R, H, W)
    m = jnp.einsum("oyx,xbw->yobw", w_eff, rx)                      # (3, C, base, W)

    xo, co = fused_upsample_conv_bilinear_add(h_img, x, ly, m, params["conv_b"])
    return xo, co


# ------------------------- pure-JAX reference (test) -------------------------

def _reference_forward(params, x, c, *, base_res, resolution):
    B = c.shape[0]
    R = resolution
    H, W = x.shape[2], x.shape[3]
    y = c @ params["lin_w"] + params["lin_b"]
    h = y * (1.0 / (1.0 + jnp.exp(-y)))
    h = h.reshape(B, 1, base_res, base_res)
    h = jnp.tile(h, (1, 4, 1, 1))
    s = R // base_res
    h = jnp.repeat(jnp.repeat(h, s, axis=2), s, axis=3)
    hp = jnp.pad(h, ((0, 0), (0, 0), (1, 1), (1, 1)))
    wconv, bconv = params["conv_w"], params["conv_b"]
    chans = []
    for co in range(4):
        acc = jnp.zeros((B, R, R), jnp.float32) + bconv[co]
        for ci in range(4):
            for ky in range(3):
                for kx in range(3):
                    acc = acc + wconv[co, ci, ky, kx] * hp[:, ci, ky:ky + R, kx:kx + R]
        chans.append(acc)
    conv = jnp.stack(chans, axis=1)                                 # (B, 4, R, R)
    wy = jnp.asarray(_bilinear_matrix(H, R))
    wx = jnp.asarray(_bilinear_matrix(W, R))
    cimg = jnp.einsum("hr,bcrs,ws->bchw", wy, conv, wx)
    return x + cimg, cimg


if __name__ == "__main__":
    secret_len = 8
    base_res = 4
    resolution = 8
    B, Cch, H, W = 2, 4, 16, 16

    key = jax.random.PRNGKey(0)
    kp, kx, kc, kw, kb = jax.random.split(key, 5)
    params = init_params(kp, secret_len, base_res)

    x = jax.random.normal(kx, (B, Cch, H, W), dtype=jnp.float32)
    c = jax.random.bernoulli(kc, 0.5, (B, secret_len)).astype(jnp.float32)

    # 1) module as initialized: zero_module conv => c_out == 0 and x_out == x
    x_out, c_out = secret_encoder_forward(params, x, c,
                                          base_res=base_res, resolution=resolution)
    jax.block_until_ready((x_out, c_out))
    assert x_out.shape == x.shape and c_out.shape == (B, Cch, H, W)
    assert bool(jnp.all(c_out == 0.0)) and bool(jnp.all(x_out == x))

    # 2) general (non-zero) conv parameters: validate the channel-folded conv,
    #    folded upsample/pad/tap-shift matrices, and fused bilinear+add against
    #    a JAX reference.
    params_nz = dict(params)
    params_nz["conv_w"] = 0.1 * jax.random.normal(kw, (4, 4, 3, 3), dtype=jnp.float32)
    params_nz["conv_b"] = 0.1 * jax.random.normal(kb, (4,), dtype=jnp.float32)
    x_out2, c_out2 = secret_encoder_forward(params_nz, x, c,
                                            base_res=base_res, resolution=resolution)
    x_ref2, c_ref2 = _reference_forward(params_nz, x, c,
                                        base_res=base_res, resolution=resolution)
    jax.block_until_ready((x_out2, c_out2))
    assert np.allclose(np.asarray(c_out2), np.asarray(c_ref2), rtol=1e-4, atol=1e-4)
    assert np.allclose(np.asarray(x_out2), np.asarray(x_ref2), rtol=1e-4, atol=1e-4)

    print("KERNEL_OK")
</pallas_src>

<mosaic_0001>
module attributes {stable_mosaic.version = 11 : i64} {
  func.func @_linear_silu_kernel(%arg0: memref<2x8xf32, #tpu.memory_space<vmem>>, %arg1: memref<8x16xf32, #tpu.memory_space<vmem>>, %arg2: memref<1x16xf32, #tpu.memory_space<vmem>>, %arg3: memref<2x16xf32, #tpu.memory_space<vmem>>) attributes {dimension_semantics = [], scalar_prefetch = 0 : i64, scratch_operands = 0 : i64, tpu.core_type = #tpu.core_type<tc>} {
    %c0 = arith.constant 0 : index
    %c0_0 = arith.constant 0 : index
    %0 = vector.load %arg0[%c0, %c0_0] : memref<2x8xf32, #tpu.memory_space<vmem>>, vector<2x8xf32>
    %c0_1 = arith.constant 0 : index
    %c0_2 = arith.constant 0 : index
    %1 = vector.load %arg1[%c0_1, %c0_2] : memref<8x16xf32, #tpu.memory_space<vmem>>, vector<8x16xf32>
    %cst = arith.constant dense<0.000000e+00> : vector<2x16xf32>
    %2 = tpu.matmul %0, %1, %cst {dimension_numbers = #tpu.dot_dimension_numbers<[1], [0], [0], [1], [0, 0, 1, 1], [], []>} : vector<2x8xf32>, vector<8x16xf32>, vector<2x16xf32> -> vector<2x16xf32>
    %c0_3 = arith.constant 0 : index
    %c0_4 = arith.constant 0 : index
    %3 = vector.load %arg2[%c0_3, %c0_4] : memref<1x16xf32, #tpu.memory_space<vmem>>, vector<1x16xf32>
    %4 = vector.broadcast %3 : vector<1x16xf32> to vector<2x16xf32>
    %5 = arith.addf %2, %4 : vector<2x16xf32>
    %cst_5 = arith.constant 0.000000e+00 : f32
    %6 = vector.broadcast %cst_5 : f32 to vector<2x16xf32>
    %7 = arith.subf %6, %5 : vector<2x16xf32>
    %8 = math.exp %7 : vector<2x16xf32>
    %cst_6 = arith.constant 1.000000e+00 : f32
    %9 = vector.broadcast %cst_6 : f32 to vector<2x16xf32>
    %10 = arith.addf %9, %8 : vector<2x16xf32>
    %cst_7 = arith.constant 1.000000e+00 : f32
    %11 = vector.broadcast %cst_7 : f32 to vector<2x16xf32>
    %12 = arith.divf %11, %10 : vector<2x16xf32>
    %13 = arith.mulf %5, %12 : vector<2x16xf32>
    %c0_8 = arith.constant 0 : index
    %c0_9 = arith.constant 0 : index
    %14 = vector.load %arg3[%c0_8, %c0_9] : memref<2x16xf32, #tpu.memory_space<vmem>>, vector<2x16xf32>
    tpu.vector_store %arg3[%c0_8, %c0_9], %13 {strides = array<i32>} : memref<2x16xf32, #tpu.memory_space<vmem>>, vector<2x16xf32>,
    return
  }
}

</mosaic_0001>

<llo_original>
// kernel: tpu_custom_call.1
$region0: #{tpu_custom_call.1}
  #allocation0 [shape = 'u32[]', space=smem, size = 0x4, offset = 0x4, fixed_abs, tag = 'smem constant byte address 0x4 - core index']
  #allocation1 [shape = 'u32[72,128]{1,0:T(1,128)}', space=vmem, size = 0x9000, scoped, tag = 'internal scratch']
  %s0 = inlined_call_operand.hbm [shape: f32[2,8], index: 0, kind: input, shape index: {}]
  %s1 = inlined_call_operand.hbm [shape: f32[8,16], index: 1, kind: input, shape index: {}]
  %s2 = inlined_call_operand.vmem [shape: f32[1,16], index: 2, kind: input, shape index: {}]
  %s3 = inlined_call_operand.hbm [shape: f32[2,16], index: 3, kind: output, shape index: {}]
  %s4 = sld [smem:[#allocation0]]
  $region30: #{tpu_custom_call.1} parent=0
    _
  %s6 = ssub.s32 1, %s4
  %s7 = scalar_select 0, %s6, %s4
  $region1: #{tpu_custom_call.1} parent=0
    #allocation2 [shape = 'u8[1024]{0}', space=vmem, size = 0x400, scoped, tag = 'input window, operand 0, single buffered']
    #allocation3 [shape = 's32[1]{0}', space=sflag, size = 0x4, scoped, tag = 'scoped memory for tpu_custom_call.1']
    #allocation4 [shape = 's32[1]{0}', space=sflag, size = 0x4, scoped, tag = 'scoped memory for tpu_custom_call.1']
    #allocation5 [shape = 'u8[4096]{0}', space=vmem, size = 0x1000, scoped, tag = 'input window, operand 1, single buffered']
    #allocation6 [shape = 's32[1]{0}', space=sflag, size = 0x4, scoped, tag = 'scoped memory for tpu_custom_call.1']
    #allocation7 [shape = 'u8[1024]{0}', space=vmem, size = 0x400, scoped, tag = 'output window, operand 0, single buffered']
    %8 = vsyncpa [#allocation3], 0
    %9 = vsyncpa [#allocation6], 0
    %10 = vsyncpa [#allocation4], 0
    // Predicated region
    $region2: #{tpu_custom_call.1} parent=1 // pred_check
      _
    $region3: #{tpu_custom_call.1} parent=1 // pred_check_branch
      %12 = sbr.rel (0) target = $region5
    $region4: #{tpu_custom_call.1} parent=1 // pred_region
      %14 = vsyncadd [#allocation3], 0
      %s16 = sshll.u32 %s0, 4
      %s17 = int_to_ptr.hbm [resolvable:$true] %s16
      %s18 = sshll.u32 [#allocation2], 4
      %s19 = int_to_ptr.vmem [resolvable:$true] %s18
      %21 = dma.hbm_to_vmem [thread:$0]  %s17, 32, %s19, [#allocation3]
    $region5: #{tpu_custom_call.1} parent=1 // pred_fallthru
      _
    // Predicated region
    $region6: #{tpu_custom_call.1} parent=1 // pred_check
      _
    $region7: #{tpu_custom_call.1} parent=1 // pred_check_branch
      %23 = sbr.rel (0) target = $region9
    $region8: #{tpu_custom_call.1} parent=1 // pred_region
      %25 = vsyncadd [#allocation6], 0
      %s27 = sshll.u32 %s1, 4
      %s28 = int_to_ptr.hbm [resolvable:$true] %s27
      %s29 = sshll.u32 [#allocation5], 4
      %s30 = int_to_ptr.vmem [resolvable:$true] %s29
      %32 = dma.hbm_to_vmem [thread:$0]  %s28, 128, %s30, [#allocation6]
    $region9: #{tpu_custom_call.1} parent=1 // pred_fallthru
      _
    // Predicated region
    $region10: #{tpu_custom_call.1} parent=1 // pred_check
      _
    $region11: #{tpu_custom_call.1} parent=1 // pred_check_branch
      %34 = sbr.rel (0) target = $region13
    $region12: #{tpu_custom_call.1} parent=1 // pred_region
      _
    $region13: #{tpu_custom_call.1} parent=1 // pred_fallthru
      _
    // Predicated region
    $region14: #{tpu_custom_call.1} parent=1 // pred_check
      _
    $region15: #{tpu_custom_call.1} parent=1 // pred_check_branch
      %36 = sbr.rel (0) target = $region17
    $region16: #{tpu_custom_call.1} parent=1 // pred_region
      %38 = dma.done [#allocation3], 32
    $region17: #{tpu_custom_call.1} parent=1 // pred_fallthru
      _
    // Predicated region
    $region18: #{tpu_custom_call.1} parent=1 // pred_check
      _
    $region19: #{tpu_custom_call.1} parent=1 // pred_check_branch
      %40 = sbr.rel (0) target = $region21
    $region20: #{tpu_custom_call.1} parent=1 // pred_region
      %42 = dma.done [#allocation6], 128
    $region21: #{tpu_custom_call.1} parent=1 // pred_fallthru
      _
    %v43 = vld [vmem:[#allocation2] sm:$0x3]
    %v44 = vld [vmem:[#allocation5] sm:$0xff]
    %v45 = vld [vmem:[%s2] sm:$0x1]
    %v47 = vperm.slane %v45, 0
    %vm49 = vcmask 64512
    %v51 = vsel %vm49, %v43, 0
    %53 = vmatpush.msra.mxu0 0.0
    %54 = vmatpush.msra.mxu0 0.0
    %55 = vmatpush.msra.mxu0 0.0
    %56 = vmatpush.msra.mxu0 0.0
    %57 = vmatpush.msra.mxu0 0.0
    %58 = vmatpush.msra.mxu0 0.0
    %59 = vmatpush.msra.mxu0 0.0
    %60 = vmatpush.msra.mxu0 0.0
    %61 = vmatpush.msra.mxu0 0.0
    %62 = vmatpush.msra.mxu0 0.0
    %63 = vmatpush.msra.mxu0 0.0
    %64 = vmatpush.msra.mxu0 0.0
    %65 = vmatpush.msra.mxu0 0.0
    %66 = vmatpush.msra.mxu0 0.0
    %67 = vmatpush.msra.mxu0 0.0
    %68 = vmatpush.msra.mxu0 %v44
    %69 = vmatmul.f32.gmra.mxu0 %v51
    %v70 = vpop.f32.mrf.mxu0
    %v71 = vadd.f32 %v47, %v70
    %72 = vdwg.mxu0
    %v73 = vsub.f32 0.0, %v71
    %v74 = vmul.f32 %v73, 1.442695
    %v75 = vpow.pop %v74
    %v76 = vadd.f32 %v75, 1.0
    %v77 = vrcp.pop %v76
    %v78 = vmul.f32 %v76, %v77
    %v79 = vsub.f32 1.0, %v78
    %v80 = vmul.f32 %v77, %v79
    %v81 = vadd.f32 %v77, %v80
    %vm82 = vweird.f32 %v76
    %vm83 = vweird.f32 %v77
    %vm84 = vmor %vm82, %vm83
    %v85 = vsel %vm84, %v77, %v81
    %v86 = vand.u32 2147483647, %v76
    %vm87 = vcmp.eq.f32.partialorder %v86, 8.507059e+37
    %v88 = vand.u32 %v76, 2147483648
    %v89 = vor.u32 1.1754944e-38, %v88
    %v90 = vsel %vm87, %v89, %v85
    %v91 = vmul.f32 1.0, %v90
    %v92 = vmul.f32 %v71, %v91
    %vm93 = vcmask 123904
    %94 = vst.msk [vmem:[#allocation7] sm:$0x3] %vm93, %v92
    // Predicated region
    $region22: #{tpu_custom_call.1} parent=1 // pred_check
      _
    $region23: #{tpu_custom_call.1} parent=1 // pred_check_branch
      %96 = sbr.rel (0) target = $region25
    $region24: #{tpu_custom_call.1} parent=1 // pred_region
      %98 = vsyncadd [#allocation4], 0
      %s100 = sshll.u32 [#allocation7], 4
      %s101 = int_to_ptr.vmem [resolvable:$true] %s100
      %s102 = sshll.u32 %s3, 4
      %s103 = int_to_ptr.hbm [resolvable:$true] %s102
      %105 = dma.vmem_to_hbm [thread:$0]  %s101, 32, %s103, [#allocation4]
    $region25: #{tpu_custom_call.1} parent=1 // pred_fallthru
      _
    // Predicated region
    $region26: #{tpu_custom_call.1} parent=1 // pred_check
      _
    $region27: #{tpu_custom_call.1} parent=1 // pred_check_branch
      %107 = sbr.rel (0) target = $region29
    $region28: #{tpu_custom_call.1} parent=1 // pred_region
      %109 = dma.done [#allocation4], 32
    $region29: #{tpu_custom_call.1} parent=1 // pred_fallthru
      _
    %110 = vsyncpa [#allocation3], 1
    %111 = vsyncpa [#allocation6], 1
    %112 = vsyncpa [#allocation4], 1

</llo_original>
